<compile_context>
chip_gen: v7x
topology: tpu7x:2x2x1
jax: 0.10.0
libtpu: 0.0.40
codegen_flags: <defaults>
</compile_context>

<pallas_src>
import functools
import math

import jax
import jax.numpy as jnp
from jax.experimental import pallas as pl
from jax.experimental.pallas import tpu as pltpu


def _head_kernel(x_ref, w_ref, o_ref, *, n_emb, head_size):
    # x_ref: (Bb, T, C) f32   w_ref: (C, 3H) bf16   o_ref: (Bb, T, H) f32
    Bb, T, C = x_ref.shape
    H = head_size

    # ---- fused K/Q/V projection: one big MXU matmul over Bb*T rows --------
    x2d = x_ref[...].reshape(Bb * T, C).astype(jnp.bfloat16)
    kqv = jnp.dot(x2d, w_ref[...],
                  preferred_element_type=jnp.float32)          # (Bb*T, 3H) f32
    kqv = kqv.reshape(Bb, T, 3 * H)
    k = kqv[:, :, 0 * H:1 * H]
    q = kqv[:, :, 1 * H:2 * H]
    v = kqv[:, :, 2 * H:3 * H]

    # fold the 1/sqrt(n_emb) scale into q (T*H multiplies instead of T*T)
    q = q * (1.0 / math.sqrt(n_emb))

    # ---- attention scores: batched contraction over H (no k transpose) ----
    wei = jnp.einsum('bqd,bkd->bqk',
                     q.astype(jnp.bfloat16), k.astype(jnp.bfloat16),
                     preferred_element_type=jnp.float32)        # (Bb, T, T)

    # causal mask: single comparison, shared across the Bb batch rows
    row = jax.lax.broadcasted_iota(jnp.int32, (T, T), 0)
    col = jax.lax.broadcasted_iota(jnp.int32, (T, T), 1)
    causal = (col <= row)[None, :, :]
    wei = jnp.where(causal, wei, jnp.float32(-1e30))

    # ---- softmax along last axis (f32 math; EUP reciprocal) ---------------
    m = jnp.max(wei, axis=-1, keepdims=True)
    e = jnp.exp(wei - m)
    denom = jnp.sum(e, axis=-1, keepdims=True)
    p = e * pl.reciprocal(denom, approx=True)

    # dropout: identity (eval mode)

    # ---- weighted sum of values (batched, bf16 operands, f32 accum) -------
    out = jnp.einsum('bqk,bkd->bqd',
                     p.astype(jnp.bfloat16), v.astype(jnp.bfloat16),
                     preferred_element_type=jnp.float32)        # (Bb, T, H)

    o_ref[...] = out.astype(o_ref.dtype)


def head_forward(x, w_key, w_query, w_value, *, block_b=None):
    """x: [B, T, C] float32; w_*: [C, H] float32 (pre-transposed Linear weights)."""
    B, T, C = x.shape
    H = w_key.shape[1]

    # One-time wrapper-side fusion + cast of the projection weights: [C, 3H] bf16.
    w_kqv = jnp.concatenate([w_key, w_query, w_value], axis=1).astype(jnp.bfloat16)

    # Process several batch rows per grid step to amortize per-step overhead.
    if block_b is None:
        block_b = B if B <= 8 else max(d for d in range(1, 9) if B % d == 0)
    assert B % block_b == 0
    grid = (B // block_b,)

    kernel = functools.partial(_head_kernel, n_emb=C, head_size=H)

    return pl.pallas_call(
        kernel,
        out_shape=jax.ShapeDtypeStruct((B, T, H), x.dtype),
        grid_spec=pltpu.PrefetchScalarGridSpec(
            num_scalar_prefetch=0,
            grid=grid,
            in_specs=[
                pl.BlockSpec((block_b, T, C), lambda b: (b, 0, 0)),
                pl.BlockSpec((C, 3 * H), lambda b: (0, 0)),
            ],
            out_specs=pl.BlockSpec((block_b, T, H), lambda b: (b, 0, 0)),
        ),
        compiler_params=pltpu.CompilerParams(
            dimension_semantics=("parallel",)),
    )(x, w_kqv)


def head_reference(x, w_key, w_query, w_value):
    """Pure-JAX f32 reference identical to the PyTorch forward (eval mode)."""
    B, T, C = x.shape
    k = x @ w_key
    q = x @ w_query
    v = x @ w_value
    wei = jnp.einsum("btd,bsd->bts", q, k) / math.sqrt(C)
    mask = jnp.tril(jnp.ones((T, T), dtype=bool))
    wei = jnp.where(mask, wei, -jnp.inf)
    wei = jax.nn.softmax(wei, axis=-1)
    return wei @ v


if __name__ == "__main__":
    # Small shapes consistent with the module: BLOCK_SIZE (= T) = 8,
    # n_emb = 32, head_size = 16, batch = 2.
    B, T, n_emb, head_size = 2, 8, 32, 16

    key = jax.random.PRNGKey(0)
    kx, kk, kq, kv = jax.random.split(key, 4)

    x = jax.random.normal(kx, (B, T, n_emb), dtype=jnp.float32)

    # Deterministic init matching nn.Linear default: U(-1/sqrt(fan_in), 1/sqrt(fan_in)).
    bound = 1.0 / math.sqrt(n_emb)
    w_key = jax.random.uniform(kk, (n_emb, head_size), jnp.float32, -bound, bound)
    w_query = jax.random.uniform(kq, (n_emb, head_size), jnp.float32, -bound, bound)
    w_value = jax.random.uniform(kv, (n_emb, head_size), jnp.float32, -bound, bound)

    out = head_forward(x, w_key, w_query, w_value)
    out = jax.block_until_ready(out)

    ref = head_reference(x, w_key, w_query, w_value)
    assert out.shape == (B, T, head_size)
    # bf16 matmul operands + approx reciprocal => loosened tolerance vs f32 ref.
    assert jnp.allclose(out, ref, atol=3e-2, rtol=3e-2), "mismatch vs reference"

    print("KERNEL_OK")
</pallas_src>

<mosaic_0001>
module attributes {stable_mosaic.version = 11 : i64} {
  func.func @_head_kernel(%arg0: i32, %arg1: memref<2x8x32xf32, #tpu.memory_space<vmem>>, %arg2: memref<32x48xbf16, #tpu.memory_space<vmem>>, %arg3: memref<2x8x16xf32, #tpu.memory_space<vmem>>) attributes {dimension_semantics = [#tpu.dimension_semantics<parallel>], iteration_bounds = array<i64: 1>, scalar_prefetch = 0 : i64, scratch_operands = 0 : i64, tpu.core_type = #tpu.core_type<tc>, window_params = [{transform_indices = @transform_0, window_bounds = array<i64: 2, 8, 32>}, {pipeline_mode = #tpu.pipeline_mode<synchronous>, transform_indices = @transform_1, window_bounds = array<i64: 32, 48>}, {transform_indices = @transform_2, window_bounds = array<i64: 2, 8, 16>}]} {
    %c0 = arith.constant 0 : index
    %c0_0 = arith.constant 0 : index
    %c0_1 = arith.constant 0 : index
    %0 = vector.load %arg1[%c0, %c0_0, %c0_1] : memref<2x8x32xf32, #tpu.memory_space<vmem>>, vector<2x8x32xf32>
    %1 = vector.shape_cast %0 : vector<2x8x32xf32> to vector<16x32xf32>
    %2 = arith.truncf %1 : vector<16x32xf32> to vector<16x32xbf16>
    %c0_2 = arith.constant 0 : index
    %c0_3 = arith.constant 0 : index
    %3 = vector.load %arg2[%c0_2, %c0_3] : memref<32x48xbf16, #tpu.memory_space<vmem>>, vector<32x48xbf16>
    %cst = arith.constant dense<0.000000e+00> : vector<16x48xf32>
    %4 = tpu.matmul %2, %3, %cst {dimension_numbers = #tpu.dot_dimension_numbers<[1], [0], [0], [1], [0, 0, 1, 1], [], []>} : vector<16x32xbf16>, vector<32x48xbf16>, vector<16x48xf32> -> vector<16x48xf32>
    %5 = vector.shape_cast %4 : vector<16x48xf32> to vector<2x8x48xf32>
    %6 = vector.extract_strided_slice %5 {offsets = [0, 0, 0], sizes = [2, 8, 16], strides = [1, 1, 1]} : vector<2x8x48xf32> to vector<2x8x16xf32>
    %7 = vector.extract_strided_slice %5 {offsets = [0, 0, 16], sizes = [2, 8, 16], strides = [1, 1, 1]} : vector<2x8x48xf32> to vector<2x8x16xf32>
    %8 = vector.extract_strided_slice %5 {offsets = [0, 0, 32], sizes = [2, 8, 16], strides = [1, 1, 1]} : vector<2x8x48xf32> to vector<2x8x16xf32>
    %cst_4 = arith.constant 0.176776692 : f32
    %9 = vector.broadcast %cst_4 : f32 to vector<2x8x16xf32>
    %10 = arith.mulf %7, %9 : vector<2x8x16xf32>
    %11 = arith.truncf %10 : vector<2x8x16xf32> to vector<2x8x16xbf16>
    %12 = arith.truncf %6 : vector<2x8x16xf32> to vector<2x8x16xbf16>
    "tpu.trace_start"() <{level = 10 : i32, message = "bqd,bkd->bqk"}> : () -> ()
    %cst_5 = arith.constant dense<0.000000e+00> : vector<2x8x8xf32>
    %13 = tpu.matmul %11, %12, %cst_5 {dimension_numbers = #tpu.dot_dimension_numbers<[2], [2], [1], [1], [0, 0, 0, 1, 1, 1], [0], [0]>} : vector<2x8x16xbf16>, vector<2x8x16xbf16>, vector<2x8x8xf32> -> vector<2x8x8xf32>
    "tpu.trace_stop"() : () -> ()
    %14 = tpu.iota {dimensions = array<i32: 0>} : vector<8x8xi32>
    %15 = tpu.iota {dimensions = array<i32: 1>} : vector<8x8xi32>
    %16 = arith.cmpi sle, %15, %14 : vector<8x8xi32>
    %17 = vector.shape_cast %16 : vector<8x8xi1> to vector<1x8x8xi1>
    %cst_6 = arith.constant -1.000000e+30 : f32
    %18 = vector.shape_cast %17 : vector<1x8x8xi1> to vector<1x8x8xi1>
    %19 = vector.broadcast %18 : vector<1x8x8xi1> to vector<2x8x8xi1>
    %20 = vector.broadcast %cst_6 : f32 to vector<2x8x8xf32>
    %21 = arith.select %19, %13, %20 : vector<2x8x8xi1>, vector<2x8x8xf32>
    %cst_7 = arith.constant dense<0xFF800000> : vector<2x8xf32>
    %22 = vector.multi_reduction <maximumf>, %21, %cst_7 [2] : vector<2x8x8xf32> to vector<2x8xf32>
    %23 = vector.shape_cast %22 : vector<2x8xf32> to vector<2x8x1xf32>
    %24 = vector.broadcast %23 : vector<2x8x1xf32> to vector<2x8x8xf32>
    %25 = arith.subf %21, %24 : vector<2x8x8xf32>
    %26 = math.exp %25 : vector<2x8x8xf32>
    %cst_8 = arith.constant dense<0.000000e+00> : vector<2x8xf32>
    %27 = vector.multi_reduction <add>, %26, %cst_8 [2] : vector<2x8x8xf32> to vector<2x8xf32>
    %28 = vector.shape_cast %27 : vector<2x8xf32> to vector<2x8x1xf32>
    %29 = tpu.reciprocal %28 {approx = true} : vector<2x8x1xf32> -> vector<2x8x1xf32>
    %30 = vector.broadcast %29 : vector<2x8x1xf32> to vector<2x8x8xf32>
    %31 = arith.mulf %26, %30 : vector<2x8x8xf32>
    %32 = arith.truncf %31 : vector<2x8x8xf32> to vector<2x8x8xbf16>
    %33 = arith.truncf %8 : vector<2x8x16xf32> to vector<2x8x16xbf16>
    "tpu.trace_start"() <{level = 10 : i32, message = "bqk,bkd->bqd"}> : () -> ()
    %cst_9 = arith.constant dense<0.000000e+00> : vector<2x8x16xf32>
    %34 = tpu.matmul %32, %33, %cst_9 {dimension_numbers = #tpu.dot_dimension_numbers<[2], [1], [1], [2], [0, 0, 0, 1, 1, 2], [0], [0]>} : vector<2x8x8xbf16>, vector<2x8x16xbf16>, vector<2x8x16xf32> -> vector<2x8x16xf32>
    "tpu.trace_stop"() : () -> ()
    %c0_10 = arith.constant 0 : index
    %c0_11 = arith.constant 0 : index
    %c0_12 = arith.constant 0 : index
    %35 = vector.load %arg3[%c0_10, %c0_11, %c0_12] : memref<2x8x16xf32, #tpu.memory_space<vmem>>, vector<2x8x16xf32>
    tpu.vector_store %arg3[%c0_10, %c0_11, %c0_12], %34 {strides = array<i32>} : memref<2x8x16xf32, #tpu.memory_space<vmem>>, vector<2x8x16xf32>,
    return
  }
  func.func @transform_0(%arg0: i32) -> (i32, i32, i32) {
    %c0_i32 = arith.constant 0 : i32
    %c0_i32_0 = arith.constant 0 : i32
    %c0_i32_1 = arith.constant 0 : i32
    return %arg0, %c0_i32, %c0_i32_0 : i32, i32, i32
  }
  func.func @transform_1(%arg0: i32) -> (i32, i32) {
    %c0_i32 = arith.constant 0 : i32
    %c0_i32_0 = arith.constant 0 : i32
    %c0_i32_1 = arith.constant 0 : i32
    return %c0_i32, %c0_i32_0 : i32, i32
  }
  func.func @transform_2(%arg0: i32) -> (i32, i32, i32) {
    %c0_i32 = arith.constant 0 : i32
    %c0_i32_0 = arith.constant 0 : i32
    %c0_i32_1 = arith.constant 0 : i32
    return %arg0, %c0_i32, %c0_i32_0 : i32, i32, i32
  }
}

</mosaic_0001>

<llo_original>
// kernel: tpu_custom_call.1
$region0: #{tpu_custom_call.1}
  #allocation0 [shape = 'u32[]', space=smem, size = 0x4, offset = 0x4, fixed_abs, tag = 'smem constant byte address 0x4 - core index']
  #allocation1 [shape = 'u32[144,128]{1,0:T(1,128)}', space=vmem, size = 0x12000, scoped, tag = 'internal scratch']
  %s0 = inlined_call_operand.hbm [shape: f32[2,8,32], index: 0, kind: input, shape index: {}]
  %s1 = inlined_call_operand.hbm [shape: bf16[32,48], index: 1, kind: input, shape index: {}]
  %s2 = inlined_call_operand.hbm [shape: f32[2,8,16], index: 2, kind: output, shape index: {}]
  %s3 = sld [smem:[#allocation0]]
  $region26: #{tpu_custom_call.1} parent=0
    _
  %s5 = ssub.s32 1, %s3
  %s6 = scalar_select 0, %s5, %s3
  $region1: #{tpu_custom_call.1} parent=0
    #allocation2 [shape = 'u8[8192]{0}', space=vmem, size = 0x2000, scoped, tag = 'input window, operand 0, single buffered']
    #allocation3 [shape = 's32[1]{0}', space=sflag, size = 0x4, scoped, tag = 'scoped memory for tpu_custom_call.1']
    #allocation4 [shape = 's32[1]{0}', space=sflag, size = 0x4, scoped, tag = 'scoped memory for tpu_custom_call.1']
    #allocation5 [shape = 'u8[8192]{0}', space=vmem, size = 0x2000, scoped, tag = 'input window, operand 1, single buffered']
    #allocation6 [shape = 's32[1]{0}', space=sflag, size = 0x4, scoped, tag = 'scoped memory for tpu_custom_call.1']
    #allocation7 [shape = 'u8[8192]{0}', space=vmem, size = 0x2000, scoped, tag = 'output window, operand 0, single buffered']
    %7 = vsyncpa [#allocation3], 0
    %8 = vsyncpa [#allocation6], 0
    %9 = vsyncpa [#allocation4], 0
    // Predicated region
    $region2: #{tpu_custom_call.1} parent=1 // pred_check
      _
    $region3: #{tpu_custom_call.1} parent=1 // pred_check_branch
      %11 = sbr.rel (0) target = $region5
    $region4: #{tpu_custom_call.1} parent=1 // pred_region
      %s13 = ssub.s32 256, 256
      %14 = vsyncadd [#allocation3], %s13
      %s15 = sshll.u32 [#allocation2], 4
      %s16 = int_to_ptr.vmem [resolvable:$true] %s15
      %21 = dma.hbm_to_vmem [thread:$0]  %s0, 256, %s16, [#allocation3], 128, 128, 8
    $region5: #{tpu_custom_call.1} parent=1 // pred_fallthru
      _
    // Predicated region
    $region6: #{tpu_custom_call.1} parent=1 // pred_check
      _
    $region7: #{tpu_custom_call.1} parent=1 // pred_check_branch
      %23 = sbr.rel (0) target = $region9
    $region8: #{tpu_custom_call.1} parent=1 // pred_region
      %s25 = ssub.s32 256, 256
      %26 = vsyncadd [#allocation6], %s25
      %s27 = sshll.u32 [#allocation5], 4
      %s28 = int_to_ptr.vmem [resolvable:$true] %s27
      %33 = dma.hbm_to_vmem [thread:$0]  %s1, 256, %s28, [#allocation6], 64, 64, 4
    $region9: #{tpu_custom_call.1} parent=1 // pred_fallthru
      _
    // Predicated region
    $region10: #{tpu_custom_call.1} parent=1 // pred_check
      _
    $region11: #{tpu_custom_call.1} parent=1 // pred_check_branch
      %35 = sbr.rel (0) target = $region13
    $region12: #{tpu_custom_call.1} parent=1 // pred_region
      %36 = dma.done [#allocation3], 256
    $region13: #{tpu_custom_call.1} parent=1 // pred_fallthru
      _
    // Predicated region
    $region14: #{tpu_custom_call.1} parent=1 // pred_check
      _
    $region15: #{tpu_custom_call.1} parent=1 // pred_check_branch
      %38 = sbr.rel (0) target = $region17
    $region16: #{tpu_custom_call.1} parent=1 // pred_region
      %39 = dma.done [#allocation6], 256
    $region17: #{tpu_custom_call.1} parent=1 // pred_fallthru
      _
    %v41 = vld [vmem:[#allocation2] sm:$0xff]
    %v42 = vld [vmem:[#allocation2 + $0x8] sm:$0xff]
    %v43 = vpack.c.bf16 %v42, %v41
    %v44 = vld [vmem:[#allocation5] sm:$0xf]
    %v45 = vld [vmem:[#allocation5 + $0x4] sm:$0xf]
    %v46 = vld [vmem:[#allocation5 + $0x8] sm:$0xf]
    %v47 = vld [vmem:[#allocation5 + $0xc] sm:$0xf]
    %v52 = vunpack.c.l.b16 %v44
    %v53 = vunpack.c.l.b16 %v45
    %v54 = vunpack.c.l.b16 %v46
    %v55 = vunpack.c.l.b16 %v47
    %v56 = vpack.c.b16 %v53, %v52
    %v57 = vpack.c.b16 %v55, %v54
    %vm60 = vcmask 261120
    %v62 = vsel %vm60, %v43, 0
    %64 = vmatprep.subr.bf16.mxu0 0
    %65 = vmatpush1.bf16.msra.mxu0 %v56
    %66 = vmatprep.subr.bf16.mxu0 0
    %67 = vmatpush1.bf16.msra.mxu0 %v57
    %68 = vmatprep.subr.bf16.mxu0 0
    %69 = vmatpush1.bf16.msra.mxu0 0
    %70 = vmatprep.subr.bf16.mxu0 0
    %71 = vmatpush1.bf16.msra.mxu0 0
    %72 = vmatprep.subr.bf16.mxu0 0
    %73 = vmatpush1.bf16.msra.mxu0 0
    %74 = vmatprep.subr.bf16.mxu0 0
    %75 = vmatpush1.bf16.msra.mxu0 0
    %76 = vmatprep.subr.bf16.mxu0 0
    %77 = vmatpush1.bf16.msra.mxu0 0
    %78 = vmatprep.subr.bf16.mxu0 0
    %79 = vmatpush1.bf16.msra.mxu0 0
    %80 = vmatprep.subr.bf16.mxu0 0
    %81 = vmatpush1.bf16.msra.mxu0 0
    %82 = vmatprep.subr.bf16.mxu0 0
    %83 = vmatpush1.bf16.msra.mxu0 0
    %84 = vmatprep.subr.bf16.mxu0 0
    %85 = vmatpush1.bf16.msra.mxu0 0
    %86 = vmatprep.subr.bf16.mxu0 0
    %87 = vmatpush1.bf16.msra.mxu0 0
    %88 = vmatprep.subr.bf16.mxu0 0
    %89 = vmatpush1.bf16.msra.mxu0 0
    %90 = vmatprep.subr.bf16.mxu0 0
    %91 = vmatpush1.bf16.msra.mxu0 0
    %92 = vmatprep.subr.bf16.mxu0 0
    %93 = vmatpush1.bf16.msra.mxu0 0
    %94 = vmatprep.subr.bf16.mxu0 0
    %95 = vmatpush1.bf16.msra.mxu0 0
    %96 = vmatprep.mubr.bf16.mxu0 0
    %97 = vmatmul.mubr.bf16.gmra.mrb[0].mxu0 %v62
    %v98 = vpop.f32.mrb[0].mxu0
    %v99 = vadd.f32 0.0, %v98
    %v100 = vpop.f32.mrb[0].mxu0
    %v101 = vpop.f32.mrb[0].mxu0
    %v102 = vadd.f32 0.0, %v101
    %v103 = vpop.f32.mrb[0].mxu0
    %104 = vdwg.mxu0
    %v105 = vmul.f32 %v99, 0.17677669
    %v106 = vmul.f32 %v102, 0.17677669
    %v107 = vpack.c.bf16 %v105, %v105
    %v108 = vpack.c.bf16 %v106, %v106
    %v109 = vpack.c.bf16 %v99, %v99
    %v110 = vpack.c.bf16 %v102, %v102
    %112 = vrot.lane.b32.xlu0 %v107, 112
    %v113 = vpop.permute.xlu0 %112
    %vm114 = vcmask 130048
    %v116 = vsel %vm114, %v113, 0
    %v119 = vsel %vm114, %v109, 0
    %121 = vmatprep.subr.bf16.mxu0 0
    %122 = vmatpush1.bf16.xpose.msra.mxu0 %v119
    %123 = vmatprep.subr.bf16.mxu0 0
    %124 = vmatpush1.bf16.xpose.msra.mxu0 0
    %125 = vmatprep.subr.bf16.mxu0 0
    %126 = vmatpush1.bf16.xpose.msra.mxu0 0
    %127 = vmatprep.subr.bf16.mxu0 0
    %128 = vmatpush1.bf16.xpose.msra.mxu0 0
    %129 = vmatprep.subr.bf16.mxu0 0
    %130 = vmatpush1.bf16.xpose.msra.mxu0 0
    %131 = vmatprep.subr.bf16.mxu0 0
    %132 = vmatpush1.bf16.xpose.msra.mxu0 0
    %133 = vmatprep.subr.bf16.mxu0 0
    %134 = vmatpush1.bf16.xpose.msra.mxu0 0
    %135 = vmatprep.subr.bf16.mxu0 0
    %136 = vmatpush1.bf16.xpose.msra.mxu0 0
    %137 = vmatprep.subr.bf16.mxu0 0
    %138 = vmatpush1.bf16.xpose.msra.mxu0 0
    %139 = vmatprep.subr.bf16.mxu0 0
    %140 = vmatpush1.bf16.xpose.msra.mxu0 0
    %141 = vmatprep.subr.bf16.mxu0 0
    %142 = vmatpush1.bf16.xpose.msra.mxu0 0
    %143 = vmatprep.subr.bf16.mxu0 0
    %144 = vmatpush1.bf16.xpose.msra.mxu0 0
    %145 = vmatprep.subr.bf16.mxu0 0
    %146 = vmatpush1.bf16.xpose.msra.mxu0 0
    %147 = vmatprep.subr.bf16.mxu0 0
    %148 = vmatpush1.bf16.xpose.msra.mxu0 0
    %149 = vmatprep.subr.bf16.mxu0 0
    %150 = vmatpush1.bf16.xpose.msra.mxu0 0
    %151 = vmatprep.subr.bf16.mxu0 0
    %152 = vmatpush1.bf16.xpose.msra.mxu0 0
    %153 = vmatprep.mubr.bf16.mxu0 0
    %154 = vmatmul.mubr.bf16.gmra.mrb[0].mxu0 %v116
    %v155 = vpop.f32.mrb[0].mxu0
    %v156 = vadd.f32 0.0, %v155
    %v157 = vpop.f32.mrb[0].mxu0
    %v158 = vpop.f32.mrb[0].mxu0
    %v159 = vpop.f32.mrb[0].mxu0
    %160 = vdwg.mxu0
    %162 = vrot.lane.b32.xlu0 %v108, 112
    %v163 = vpop.permute.xlu0 %162
    %v165 = vsel %vm114, %v163, 0
    %v168 = vsel %vm114, %v110, 0
    %170 = vmatprep.subr.bf16.mxu0 0
    %171 = vmatpush1.bf16.xpose.msra.mxu0 %v168
    %172 = vmatprep.subr.bf16.mxu0 0
    %173 = vmatpush1.bf16.xpose.msra.mxu0 0
    %174 = vmatprep.subr.bf16.mxu0 0
    %175 = vmatpush1.bf16.xpose.msra.mxu0 0
    %176 = vmatprep.subr.bf16.mxu0 0
    %177 = vmatpush1.bf16.xpose.msra.mxu0 0
    %178 = vmatprep.subr.bf16.mxu0 0
    %179 = vmatpush1.bf16.xpose.msra.mxu0 0
    %180 = vmatprep.subr.bf16.mxu0 0
    %181 = vmatpush1.bf16.xpose.msra.mxu0 0
    %182 = vmatprep.subr.bf16.mxu0 0
    %183 = vmatpush1.bf16.xpose.msra.mxu0 0
    %184 = vmatprep.subr.bf16.mxu0 0
    %185 = vmatpush1.bf16.xpose.msra.mxu0 0
    %186 = vmatprep.subr.bf16.mxu0 0
    %187 = vmatpush1.bf16.xpose.msra.mxu0 0
    %188 = vmatprep.subr.bf16.mxu0 0
    %189 = vmatpush1.bf16.xpose.msra.mxu0 0
    %190 = vmatprep.subr.bf16.mxu0 0
    %191 = vmatpush1.bf16.xpose.msra.mxu0 0
    %192 = vmatprep.subr.bf16.mxu0 0
    %193 = vmatpush1.bf16.xpose.msra.mxu0 0
    %194 = vmatprep.subr.bf16.mxu0 0
    %195 = vmatpush1.bf16.xpose.msra.mxu0 0
    %196 = vmatprep.subr.bf16.mxu0 0
    %197 = vmatpush1.bf16.xpose.msra.mxu0 0
    %198 = vmatprep.subr.bf16.mxu0 0
    %199 = vmatpush1.bf16.xpose.msra.mxu0 0
    %200 = vmatprep.subr.bf16.mxu0 0
    %201 = vmatpush1.bf16.xpose.msra.mxu0 0
    %202 = vmatprep.mubr.bf16.mxu0 0
    %203 = vmatmul.mubr.bf16.gmra.mrb[0].mxu0 %v165
    %v204 = vpop.f32.mrb[0].mxu0
    %v205 = vadd.f32 0.0, %v204
    %v206 = vpop.f32.mrb[0].mxu0
    %v207 = vpop.f32.mrb[0].mxu0
    %v208 = vpop.f32.mrb[0].mxu0
    %209 = vdwg.mxu0
    %v210 = vlaneseq
    %v211 = vshrl.u32 %v210, 7
    %v212 = vlaneseq
    %v213 = vand.u32 %v212, 127
    %vm214 = vcmp.le.s32.totalorder %v213, %v211
    %v215 = vsel %vm214, 1, 0
    %vm216 = vcmp.eq.s32.totalorder %v215, 1
    %v217 = vsel %vm216, %v156, -1e+30
    %v218 = vsel %vm216, %v205, -1e+30
    %vm219 = vcmask 64512
    %v220 = vsel %vm219, %v217, -inf
    %221 = vmax.xlane.f32.xlu0 %v220
    %v222 = vpop.xlane.xlu0 %221
    %v223 = vsel %vm219, %v218, -inf
    %224 = vmax.xlane.f32.xlu0 %v223
    %v225 = vpop.xlane.xlu0 %224
    %v226 = vsub.f32 %v217, %v222
    %v227 = vsub.f32 %v218, %v225
    %v228 = vmul.f32 %v226, 1.442695
    %v229 = vpow.pop %v228
    %v230 = vmul.f32 %v227, 1.442695
    %v231 = vpow.pop %v230
    %v232 = vsel %vm219, %v229, 0.0
    %233 = vadd.xlane.f32.xlu0 %v232
    %v234 = vpop.xlane.xlu0 %233
    %v235 = vsel %vm219, %v231, 0.0
    %236 = vadd.xlane.f32.xlu0 %v235
    %v237 = vpop.xlane.xlu0 %236
    %v238 = vrcp.pop %v234
    %v239 = vrcp.pop %v237
    %v240 = vmul.f32 %v229, %v238
    %v241 = vmul.f32 %v231, %v239
    %v242 = vpack.c.bf16 %v240, %v240
    %v243 = vpack.c.bf16 %v241, %v241
    %245 = vrot.lane.b32.xlu0 %v109, 96
    %v246 = vpop.permute.xlu0 %245
    %v248 = vsel %vm219, %v242, 0
    %vm250 = vcmask 1043456
    %v252 = vsel %vm250, %v246, 0
    %254 = vmatprep.subr.bf16.mxu0 0
    %255 = vmatpush1.bf16.msra.mxu0 %v252
    %256 = vmatprep.subr.bf16.mxu0 0
    %257 = vmatpush1.bf16.msra.mxu0 0
    %258 = vmatprep.subr.bf16.mxu0 0
    %259 = vmatpush1.bf16.msra.mxu0 0
    %260 = vmatprep.subr.bf16.mxu0 0
    %261 = vmatpush1.bf16.msra.mxu0 0
    %262 = vmatprep.subr.bf16.mxu0 0
    %263 = vmatpush1.bf16.msra.mxu0 0
    %264 = vmatprep.subr.bf16.mxu0 0
    %265 = vmatpush1.bf16.msra.mxu0 0
    %266 = vmatprep.subr.bf16.mxu0 0
    %267 = vmatpush1.bf16.msra.mxu0 0
    %268 = vmatprep.subr.bf16.mxu0 0
    %269 = vmatpush1.bf16.msra.mxu0 0
    %270 = vmatprep.subr.bf16.mxu0 0
    %271 = vmatpush1.bf16.msra.mxu0 0
    %272 = vmatprep.subr.bf16.mxu0 0
    %273 = vmatpush1.bf16.msra.mxu0 0
    %274 = vmatprep.subr.bf16.mxu0 0
    %275 = vmatpush1.bf16.msra.mxu0 0
    %276 = vmatprep.subr.bf16.mxu0 0
    %277 = vmatpush1.bf16.msra.mxu0 0
    %278 = vmatprep.subr.bf16.mxu0 0
    %279 = vmatpush1.bf16.msra.mxu0 0
    %280 = vmatprep.subr.bf16.mxu0 0
    %281 = vmatpush1.bf16.msra.mxu0 0
    %282 = vmatprep.subr.bf16.mxu0 0
    %283 = vmatpush1.bf16.msra.mxu0 0
    %284 = vmatprep.subr.bf16.mxu0 0
    %285 = vmatpush1.bf16.msra.mxu0 0
    %286 = vmatprep.mubr.bf16.mxu0 0
    %287 = vmatmul.mubr.bf16.gmra.mrb[0].mxu0 %v248
    %v288 = vpop.f32.mrb[0].mxu0
    %v289 = vadd.f32 0.0, %v288
    %v290 = vpop.f32.mrb[0].mxu0
    %v291 = vpop.f32.mrb[0].mxu0
    %v292 = vpop.f32.mrb[0].mxu0
    %293 = vdwg.mxu0
    %295 = vrot.lane.b32.xlu0 %v110, 96
    %v296 = vpop.permute.xlu0 %295
    %v298 = vsel %vm219, %v243, 0
    %v301 = vsel %vm250, %v296, 0
    %303 = vmatprep.subr.bf16.mxu0 0
    %304 = vmatpush1.bf16.msra.mxu0 %v301
    %305 = vmatprep.subr.bf16.mxu0 0
    %306 = vmatpush1.bf16.msra.mxu0 0
    %307 = vmatprep.subr.bf16.mxu0 0
    %308 = vmatpush1.bf16.msra.mxu0 0
    %309 = vmatprep.subr.bf16.mxu0 0
    %310 = vmatpush1.bf16.msra.mxu0 0
    %311 = vmatprep.subr.bf16.mxu0 0
    %312 = vmatpush1.bf16.msra.mxu0 0
    %313 = vmatprep.subr.bf16.mxu0 0
    %314 = vmatpush1.bf16.msra.mxu0 0
    %315 = vmatprep.subr.bf16.mxu0 0
    %316 = vmatpush1.bf16.msra.mxu0 0
    %317 = vmatprep.subr.bf16.mxu0 0
    %318 = vmatpush1.bf16.msra.mxu0 0
    %319 = vmatprep.subr.bf16.mxu0 0
    %320 = vmatpush1.bf16.msra.mxu0 0
    %321 = vmatprep.subr.bf16.mxu0 0
    %322 = vmatpush1.bf16.msra.mxu0 0
    %323 = vmatprep.subr.bf16.mxu0 0
    %324 = vmatpush1.bf16.msra.mxu0 0
    %325 = vmatprep.subr.bf16.mxu0 0
    %326 = vmatpush1.bf16.msra.mxu0 0
    %327 = vmatprep.subr.bf16.mxu0 0
    %328 = vmatpush1.bf16.msra.mxu0 0
    %329 = vmatprep.subr.bf16.mxu0 0
    %330 = vmatpush1.bf16.msra.mxu0 0
    %331 = vmatprep.subr.bf16.mxu0 0
    %332 = vmatpush1.bf16.msra.mxu0 0
    %333 = vmatprep.subr.bf16.mxu0 0
    %334 = vmatpush1.bf16.msra.mxu0 0
    %335 = vmatprep.mubr.bf16.mxu0 0
    %336 = vmatmul.mubr.bf16.gmra.mrb[0].mxu0 %v298
    %v337 = vpop.f32.mrb[0].mxu0
    %v338 = vadd.f32 0.0, %v337
    %v339 = vpop.f32.mrb[0].mxu0
    %v340 = vpop.f32.mrb[0].mxu0
    %v341 = vpop.f32.mrb[0].mxu0
    %342 = vdwg.mxu0
    %343 = vst.msk [vmem:[#allocation7] sm:$0xff] %vm114, %v289
    %344 = vst.msk [vmem:[#allocation7 + $0x8] sm:$0xff] %vm114, %v338
    // Predicated region
    $region18: #{tpu_custom_call.1} parent=1 // pred_check
      _
    $region19: #{tpu_custom_call.1} parent=1 // pred_check_branch
      %346 = sbr.rel (0) target = $region21
    $region20: #{tpu_custom_call.1} parent=1 // pred_region
      %s348 = ssub.s32 256, 256
      %349 = vsyncadd [#allocation4], %s348
      %s350 = sshll.u32 [#allocation7], 4
      %s351 = int_to_ptr.vmem [resolvable:$true] %s350
      %356 = dma.vmem_to_hbm [thread:$0]  %s351, 256, %s2, [#allocation4], 128, 128, 8
    $region21: #{tpu_custom_call.1} parent=1 // pred_fallthru
      _
    // Predicated region
    $region22: #{tpu_custom_call.1} parent=1 // pred_check
      _
    $region23: #{tpu_custom_call.1} parent=1 // pred_check_branch
      %358 = sbr.rel (0) target = $region25
    $region24: #{tpu_custom_call.1} parent=1 // pred_region
      %359 = dma.done [#allocation4], 256
    $region25: #{tpu_custom_call.1} parent=1 // pred_fallthru
      _
    %360 = vsyncpa [#allocation3], 1
    %361 = vsyncpa [#allocation6], 1
    %362 = vsyncpa [#allocation4], 1

</llo_original>
